<compile_context>
chip_gen: v7x
topology: tpu7x:2x2x1
jax: 0.10.0
libtpu: 0.0.40
codegen_flags: <defaults>
</compile_context>

<pallas_src>
import functools

import jax
import jax.numpy as jnp
from jax.experimental import pallas as pl
from jax.experimental.pallas import tpu as pltpu

IGNORE_INDEX = 255


def _tree_sum(chunks):
    """Balanced pairwise-add tree over equally shaped arrays (short dependence chains)."""
    while len(chunks) > 1:
        nxt = [chunks[i] + chunks[i + 1] for i in range(0, len(chunks) - 1, 2)]
        if len(chunks) % 2:
            nxt.append(chunks[-1])
        chunks = nxt
    return chunks[0]


def _ce_kernel(logits_ref, tgt_ref, sum_out_ref, cnt_out_ref, sum_acc, cnt_acc,
               *, h_total, tile_h, n_inner, acc_w):
    o = pl.program_id(1)          # outer ("parallel") spatial tile
    j = pl.program_id(2)          # inner ("arbitrary") spatial tile

    @pl.when(j == 0)
    def _():
        sum_acc[...] = jnp.zeros_like(sum_acc)
        cnt_acc[...] = jnp.zeros_like(cnt_acc)

    x = logits_ref[0].astype(jnp.float32)        # (C, TILE_H): classes x lane-dense samples
    t = tgt_ref[0].astype(jnp.int32)             # (1, TILE_H): uint8 labels -> int32

    # numerically stable log-sum-exp over the (short) class / sublane axis
    m = jnp.max(x, axis=0, keepdims=True)                                  # (1, TILE_H)
    lse = jnp.log(jnp.sum(jnp.exp(x - m), axis=0, keepdims=True)) + m      # (1, TILE_H)

    # gather the logit at the target class: class iota + masked sublane sum
    cls = jax.lax.broadcasted_iota(jnp.int32, x.shape, 0)                  # (C, TILE_H)
    tgt_logit = jnp.sum(jnp.where(cls == t, x, 0.0), axis=0, keepdims=True)

    # valid = not ignore_index AND inside the true spatial extent.  The position clause masks both
    # the ragged tail of the last real block and (rare) fully out-of-range clamped blocks.
    # Masking happens BEFORE any accumulation so garbage lanes can never propagate Inf/NaN.
    blk = o * n_inner + j
    pos = jax.lax.broadcasted_iota(jnp.int32, (1, tile_h), 1) + blk * tile_h
    valid = (t != IGNORE_INDEX) & (pos < h_total)

    contrib = jnp.where(valid, lse - tgt_logit, 0.0)      # (1, TILE_H) f32
    vcnt = valid.astype(jnp.int32)                        # (1, TILE_H) i32

    # fold TILE_H lanes down to ACC_W lanes with whole-vreg adds (no 1/8-density VMEM accumulator)
    n_groups = tile_h // acc_w
    s_chunks = [contrib[:, g * acc_w:(g + 1) * acc_w] for g in range(n_groups)]
    c_chunks = [vcnt[:, g * acc_w:(g + 1) * acc_w] for g in range(n_groups)]
    sum_acc[...] += _tree_sum(s_chunks)
    cnt_acc[...] += _tree_sum(c_chunks)

    @pl.when(j == pl.num_programs(2) - 1)
    def _():
        # write the lane partials directly; the final sum happens in the JAX epilogue
        sum_out_ref[...] = sum_acc[...].reshape(sum_out_ref.shape)
        cnt_out_ref[...] = cnt_acc[...].reshape(cnt_out_ref.shape)


def _vmem_capacity_bytes():
    try:
        cap = getattr(pltpu.get_tpu_info(), "vmem_capacity_bytes", None)
        if cap:
            return int(cap)
    except Exception:
        pass
    return 64 * 1024 * 1024      # conservative fallback (v7x-sized VMEM)


def fcn_loss(out, target, *, tile_h=None):
    """out: (n, w, h) logits with w = num classes; target: int labels viewed to (n, h)."""
    n, num_classes, h = out.shape
    target = target.reshape(n, -1)               # matches target.view(n, -1)
    assert target.shape == (n, h)
    # labels fit in 8 bits by construction (classes < 256, ignore_index = 255): 4x fewer HBM bytes
    tgt3d = target.reshape(n, 1, h).astype(jnp.uint8)

    itemsize = jnp.dtype(out.dtype).itemsize
    sublane = {1: 32, 2: 16, 4: 8}.get(itemsize, 8)
    c_pad = -(-num_classes // sublane) * sublane          # sublane-padded class count in VMEM

    # generation-aware VMEM budget: <= 3/4 of physical, capped at 100 MiB
    # (v5e/v6e: 96 MiB of 128 MiB physical; v7x: 48 MiB of 64 MiB physical)
    budget = min(_vmem_capacity_bytes() * 3 // 4, 100 * 1024 * 1024)

    # per-lane VMEM bytes: double-buffered sublane-padded logits + double-buffered uint8 targets
    # (a 1-row uint8 block still pads to a 32-sublane byte tile); ~2 MiB fixed headroom on top.
    per_lane = 2 * c_pad * itemsize + 2 * 32
    vmem_cap_tile = max(128, (budget - (2 << 20)) // per_lane)
    block_cap_tile = (4 * 1024 * 1024) // (c_pad * itemsize)   # ~4 MiB logits block per grid step
    max_tile = min(vmem_cap_tile, block_cap_tile, 65536)
    max_tile = max(128, (max_tile // 128) * 128)

    if tile_h is None:
        tile_h = max_tile
    else:
        tile_h = max(128, min((int(tile_h) // 128) * 128, max_tile))
    if h <= tile_h:
        tile_h = h                     # single block: full extent, no alignment constraint

    nb = pl.cdiv(h, tile_h)            # number of spatial blocks
    n_outer = 2 if nb >= 2 else 1      # parallel outer spatial axis (keeps both v7x TCs busy)
    n_inner = pl.cdiv(nb, n_outer)
    # lane width of the per-(batch, outer) partial accumulators / outputs
    acc_w = 128 if (tile_h >= 128 and tile_h % 128 == 0) else tile_h

    kernel = functools.partial(_ce_kernel, h_total=h, tile_h=tile_h,
                               n_inner=n_inner, acc_w=acc_w)

    def in_map(b, o, j):
        # clamp so a (rare) fully out-of-range inner step re-reads the last real block;
        # its contribution is zeroed in-kernel by the pos < h mask.
        return (b, 0, jnp.minimum(o * n_inner + j, nb - 1))

    sums, cnts = pl.pallas_call(
        kernel,
        out_shape=(
            jax.ShapeDtypeStruct((n, n_outer, 1, acc_w), jnp.float32),   # lane-partial loss sums
            jax.ShapeDtypeStruct((n, n_outer, 1, acc_w), jnp.int32),     # lane-partial valid counts
        ),
        grid_spec=pltpu.PrefetchScalarGridSpec(
            num_scalar_prefetch=0,
            grid=(n, n_outer, n_inner),
            in_specs=[
                pl.BlockSpec((1, num_classes, tile_h), in_map),
                pl.BlockSpec((1, 1, tile_h), in_map),
            ],
            out_specs=[
                pl.BlockSpec((1, 1, 1, acc_w), lambda b, o, j: (b, o, 0, 0)),
                pl.BlockSpec((1, 1, 1, acc_w), lambda b, o, j: (b, o, 0, 0)),
            ],
            scratch_shapes=[
                pltpu.VMEM((1, acc_w), jnp.float32),   # running lane-partial loss sum
                pltpu.VMEM((1, acc_w), jnp.int32),     # running lane-partial valid count
            ],
        ),
        compiler_params=pltpu.CompilerParams(
            dimension_semantics=("parallel", "parallel", "arbitrary"),
            vmem_limit_bytes=int(budget)),
    )(out, tgt3d)

    total = jnp.sum(sums)
    count = jnp.sum(cnts).astype(jnp.float32)
    # NOTE: if every target is ignore_index, this is 0/0 -> NaN, matching PyTorch's behavior.
    return total / count


def _ref_loss(out, target):
    """Pure-JAX reference of CrossEntropyLoss(ignore_index=255, reduction='mean')."""
    n, w, h = out.shape
    target = target.reshape(n, -1)
    logits = jnp.transpose(out, (0, 2, 1)).reshape(n * h, w).astype(jnp.float32)
    tgt = target.reshape(n * h).astype(jnp.int32)
    valid = tgt != IGNORE_INDEX
    lse = jax.nn.logsumexp(logits, axis=-1)
    tgt_logit = jnp.take_along_axis(
        logits, jnp.clip(tgt, 0, w - 1)[:, None], axis=-1)[:, 0]
    per = jnp.where(valid, lse - tgt_logit, 0.0)
    return jnp.sum(per) / jnp.sum(valid.astype(jnp.float32))


if __name__ == "__main__":
    key = jax.random.PRNGKey(0)

    # Case 1: shapes implied by the module (batch=2, classes=4, spatial=16), single tiny tile.
    k1, k2, k3 = jax.random.split(key, 3)
    n, w, h = 2, 4, 16
    out = jax.random.normal(k1, (n, w, h), dtype=jnp.float32)
    target = jax.random.randint(k2, (n, h), 0, w, dtype=jnp.int32)
    target = jnp.where(jax.random.bernoulli(k3, 0.2, (n, h)), IGNORE_INDEX, target)
    loss = jax.block_until_ready(fcn_loss(out, target))
    ref = jax.block_until_ready(_ref_loss(out, target))
    assert jnp.allclose(loss, ref, rtol=1e-5, atol=1e-5), (loss, ref)

    # Case 2: multi-block ragged spatial axis -> exercises the parallel outer split (n_outer=2,
    # odd block count => one clamped out-of-range inner step) and the ragged-tail masking.
    k4, k5, k6 = jax.random.split(jax.random.PRNGKey(1), 3)
    n2, w2, h2 = 2, 5, 300
    out2 = jax.random.normal(k4, (n2, w2, h2), dtype=jnp.float32)
    target2 = jax.random.randint(k5, (n2, h2), 0, w2, dtype=jnp.int32)
    target2 = jnp.where(jax.random.bernoulli(k6, 0.1, (n2, h2)), IGNORE_INDEX, target2)
    loss2 = jax.block_until_ready(fcn_loss(out2, target2, tile_h=128))
    ref2 = jax.block_until_ready(_ref_loss(out2, target2))
    assert jnp.allclose(loss2, ref2, rtol=1e-5, atol=1e-5), (loss2, ref2)

    # Case 3: several 128-lane groups per tile -> exercises the in-register add-tree fold.
    k7, k8, k9 = jax.random.split(jax.random.PRNGKey(2), 3)
    n3, w3, h3 = 1, 3, 2048
    out3 = jax.random.normal(k7, (n3, w3, h3), dtype=jnp.float32)
    target3 = jax.random.randint(k8, (n3, h3), 0, w3, dtype=jnp.int32)
    target3 = jnp.where(jax.random.bernoulli(k9, 0.15, (n3, h3)), IGNORE_INDEX, target3)
    loss3 = jax.block_until_ready(fcn_loss(out3, target3, tile_h=512))
    ref3 = jax.block_until_ready(_ref_loss(out3, target3))
    assert jnp.allclose(loss3, ref3, rtol=1e-5, atol=1e-5), (loss3, ref3)

    # Case 4: bf16 logits stay bf16 in HBM; the f32 cast happens inside the kernel.
    out4 = out.astype(jnp.bfloat16)
    loss4 = jax.block_until_ready(fcn_loss(out4, target))
    ref4 = jax.block_until_ready(_ref_loss(out4.astype(jnp.float32), target))
    assert jnp.allclose(loss4, ref4, rtol=1e-4, atol=1e-4), (loss4, ref4)

    print("KERNEL_OK")
</pallas_src>

<mosaic_0001>
module attributes {stable_mosaic.version = 11 : i64} {
  func.func @_ce_kernel(%arg0: i32, %arg1: i32, %arg2: i32, %arg3: memref<1x4x16xf32, #tpu.memory_space<vmem>>, %arg4: memref<1x1x16xi8, #tpu.memory_space<vmem>>, %arg5: memref<1x1x1x16xf32, #tpu.memory_space<vmem>>, %arg6: memref<1x1x1x16xi32, #tpu.memory_space<vmem>>, %arg7: memref<1x16xf32, #tpu.memory_space<vmem>>, %arg8: memref<1x16xi32, #tpu.memory_space<vmem>>) attributes {dimension_semantics = [#tpu.dimension_semantics<parallel>, #tpu.dimension_semantics<parallel>, #tpu.dimension_semantics<arbitrary>], iteration_bounds = array<i64: 2, 1, 1>, scalar_prefetch = 0 : i64, scratch_operands = 2 : i64, tpu.core_type = #tpu.core_type<tc>, window_params = [{transform_indices = @transform_0, window_bounds = array<i64: 1, 4, 16>}, {transform_indices = @transform_1, window_bounds = array<i64: 1, 1, 16>}, {transform_indices = @transform_2, window_bounds = array<i64: 1, 1, 1, 16>}, {transform_indices = @transform_3, window_bounds = array<i64: 1, 1, 1, 16>}]} {
    %c0_i32 = arith.constant 0 : i32
    %0 = arith.cmpi eq, %arg2, %c0_i32 : i32
    %1 = arith.extui %0 : i1 to i32
    %c0_i32_0 = arith.constant 0 : i32
    %2 = arith.cmpi ne, %1, %c0_i32_0 : i32
    scf.if %2 {
      %cst_21 = arith.constant 0.000000e+00 : f32
      %48 = vector.broadcast %cst_21 : f32 to vector<1x16xf32>
      %c0_22 = arith.constant 0 : index
      %c0_23 = arith.constant 0 : index
      %49 = vector.load %arg7[%c0_22, %c0_23] : memref<1x16xf32, #tpu.memory_space<vmem>>, vector<1x16xf32>
      tpu.vector_store %arg7[%c0_22, %c0_23], %48 {strides = array<i32>} : memref<1x16xf32, #tpu.memory_space<vmem>>, vector<1x16xf32>,
      %c0_i32_24 = arith.constant 0 : i32
      %50 = vector.broadcast %c0_i32_24 : i32 to vector<1x16xi32>
      %c0_25 = arith.constant 0 : index
      %c0_26 = arith.constant 0 : index
      %51 = vector.load %arg8[%c0_25, %c0_26] : memref<1x16xi32, #tpu.memory_space<vmem>>, vector<1x16xi32>
      tpu.vector_store %arg8[%c0_25, %c0_26], %50 {strides = array<i32>} : memref<1x16xi32, #tpu.memory_space<vmem>>, vector<1x16xi32>,
    } else {
    }
    %c0 = arith.constant 0 : index
    %c0_1 = arith.constant 0 : index
    %c0_2 = arith.constant 0 : index
    %3 = vector.load %arg3[%c0, %c0_1, %c0_2] : memref<1x4x16xf32, #tpu.memory_space<vmem>>, vector<1x4x16xf32>
    %4 = vector.shape_cast %3 : vector<1x4x16xf32> to vector<4x16xf32>
    %c0_3 = arith.constant 0 : index
    %c0_4 = arith.constant 0 : index
    %c0_5 = arith.constant 0 : index
    %5 = vector.load %arg4[%c0_3, %c0_4, %c0_5] : memref<1x1x16xi8, #tpu.memory_space<vmem>>, vector<1x1x16xi8>
    %6 = vector.shape_cast %5 : vector<1x1x16xi8> to vector<1x16xi8>
    %7 = arith.extui %6 : vector<1x16xi8> to vector<1x16xi32>
    %cst = arith.constant dense<0xFF800000> : vector<16xf32>
    %8 = vector.multi_reduction <maximumf>, %4, %cst [0] : vector<4x16xf32> to vector<16xf32>
    %9 = vector.shape_cast %8 : vector<16xf32> to vector<1x16xf32>
    %10 = vector.broadcast %9 : vector<1x16xf32> to vector<4x16xf32>
    %11 = arith.subf %4, %10 : vector<4x16xf32>
    %12 = math.exp %11 : vector<4x16xf32>
    %cst_6 = arith.constant dense<0.000000e+00> : vector<16xf32>
    %13 = vector.multi_reduction <add>, %12, %cst_6 [0] : vector<4x16xf32> to vector<16xf32>
    %14 = vector.shape_cast %13 : vector<16xf32> to vector<1x16xf32>
    %15 = math.log %14 : vector<1x16xf32>
    %16 = arith.addf %15, %9 : vector<1x16xf32>
    %17 = tpu.iota {dimensions = array<i32: 0>} : vector<4x16xi32>
    %18 = vector.broadcast %7 : vector<1x16xi32> to vector<4x16xi32>
    %19 = arith.cmpi eq, %17, %18 : vector<4x16xi32>
    %cst_7 = arith.constant 0.000000e+00 : f32
    %20 = vector.broadcast %cst_7 : f32 to vector<4x16xf32>
    %21 = arith.select %19, %4, %20 : vector<4x16xi1>, vector<4x16xf32>
    %cst_8 = arith.constant dense<0.000000e+00> : vector<16xf32>
    %22 = vector.multi_reduction <add>, %21, %cst_8 [0] : vector<4x16xf32> to vector<16xf32>
    %23 = vector.shape_cast %22 : vector<16xf32> to vector<1x16xf32>
    %c1_i32 = arith.constant 1 : i32
    %24 = arith.muli %arg1, %c1_i32 : i32
    %25 = arith.addi %24, %arg2 : i32
    %26 = tpu.iota {dimensions = array<i32: 1>} : vector<1x16xi32>
    %c16_i32 = arith.constant 16 : i32
    %27 = arith.muli %25, %c16_i32 : i32
    %28 = vector.broadcast %27 : i32 to vector<1x16xi32>
    %29 = arith.addi %26, %28 : vector<1x16xi32>
    %c255_i32 = arith.constant 255 : i32
    %30 = vector.broadcast %c255_i32 : i32 to vector<1x16xi32>
    %31 = arith.cmpi ne, %7, %30 : vector<1x16xi32>
    %c16_i32_9 = arith.constant 16 : i32
    %32 = vector.broadcast %c16_i32_9 : i32 to vector<1x16xi32>
    %33 = arith.cmpi slt, %29, %32 : vector<1x16xi32>
    %34 = arith.andi %31, %33 : vector<1x16xi1>
    %35 = arith.subf %16, %23 : vector<1x16xf32>
    %cst_10 = arith.constant 0.000000e+00 : f32
    %36 = vector.broadcast %cst_10 : f32 to vector<1x16xf32>
    %37 = arith.select %34, %35, %36 : vector<1x16xi1>, vector<1x16xf32>
    %38 = arith.extui %34 : vector<1x16xi1> to vector<1x16xi32>
    %c0_11 = arith.constant 0 : index
    %c0_12 = arith.constant 0 : index
    %39 = vector.load %arg7[%c0_11, %c0_12] : memref<1x16xf32, #tpu.memory_space<vmem>>, vector<1x16xf32>
    %40 = arith.addf %39, %37 : vector<1x16xf32>
    %c0_13 = arith.constant 0 : index
    %c0_14 = arith.constant 0 : index
    %41 = vector.load %arg7[%c0_13, %c0_14] : memref<1x16xf32, #tpu.memory_space<vmem>>, vector<1x16xf32>
    tpu.vector_store %arg7[%c0_13, %c0_14], %40 {strides = array<i32>} : memref<1x16xf32, #tpu.memory_space<vmem>>, vector<1x16xf32>,
    %c0_15 = arith.constant 0 : index
    %c0_16 = arith.constant 0 : index
    %42 = vector.load %arg8[%c0_15, %c0_16] : memref<1x16xi32, #tpu.memory_space<vmem>>, vector<1x16xi32>
    %43 = arith.addi %42, %38 : vector<1x16xi32>
    %c0_17 = arith.constant 0 : index
    %c0_18 = arith.constant 0 : index
    %44 = vector.load %arg8[%c0_17, %c0_18] : memref<1x16xi32, #tpu.memory_space<vmem>>, vector<1x16xi32>
    tpu.vector_store %arg8[%c0_17, %c0_18], %43 {strides = array<i32>} : memref<1x16xi32, #tpu.memory_space<vmem>>, vector<1x16xi32>,
    %c0_i32_19 = arith.constant 0 : i32
    %45 = arith.cmpi eq, %arg2, %c0_i32_19 : i32
    %46 = arith.extui %45 : i1 to i32
    %c0_i32_20 = arith.constant 0 : i32
    %47 = arith.cmpi ne, %46, %c0_i32_20 : i32
    scf.if %47 {
      %c0_21 = arith.constant 0 : index
      %c0_22 = arith.constant 0 : index
      %48 = vector.load %arg7[%c0_21, %c0_22] : memref<1x16xf32, #tpu.memory_space<vmem>>, vector<1x16xf32>
      %49 = vector.shape_cast %48 : vector<1x16xf32> to vector<1x1x1x16xf32>
      %c0_23 = arith.constant 0 : index
      %c0_24 = arith.constant 0 : index
      %c0_25 = arith.constant 0 : index
      %c0_26 = arith.constant 0 : index
      %50 = vector.load %arg5[%c0_23, %c0_24, %c0_25, %c0_26] : memref<1x1x1x16xf32, #tpu.memory_space<vmem>>, vector<1x1x1x16xf32>
      tpu.vector_store %arg5[%c0_23, %c0_24, %c0_25, %c0_26], %49 {strides = array<i32>} : memref<1x1x1x16xf32, #tpu.memory_space<vmem>>, vector<1x1x1x16xf32>,
      %c0_27 = arith.constant 0 : index
      %c0_28 = arith.constant 0 : index
      %51 = vector.load %arg8[%c0_27, %c0_28] : memref<1x16xi32, #tpu.memory_space<vmem>>, vector<1x16xi32>
      %52 = vector.shape_cast %51 : vector<1x16xi32> to vector<1x1x1x16xi32>
      %c0_29 = arith.constant 0 : index
      %c0_30 = arith.constant 0 : index
      %c0_31 = arith.constant 0 : index
      %c0_32 = arith.constant 0 : index
      %53 = vector.load %arg6[%c0_29, %c0_30, %c0_31, %c0_32] : memref<1x1x1x16xi32, #tpu.memory_space<vmem>>, vector<1x1x1x16xi32>
      tpu.vector_store %arg6[%c0_29, %c0_30, %c0_31, %c0_32], %52 {strides = array<i32>} : memref<1x1x1x16xi32, #tpu.memory_space<vmem>>, vector<1x1x1x16xi32>,
    } else {
    }
    return
  }
  func.func @transform_0(%arg0: i32, %arg1: i32, %arg2: i32) -> (i32, i32, i32) {
    %c1_i32 = arith.constant 1 : i32
    %0 = arith.muli %arg1, %c1_i32 : i32
    %1 = arith.addi %0, %arg2 : i32
    %c0_i32 = arith.constant 0 : i32
    %2 = arith.minsi %1, %c0_i32 : i32
    %c0_i32_0 = arith.constant 0 : i32
    %c0_i32_1 = arith.constant 0 : i32
    return %arg0, %c0_i32_0, %2 : i32, i32, i32
  }
  func.func @transform_1(%arg0: i32, %arg1: i32, %arg2: i32) -> (i32, i32, i32) {
    %c1_i32 = arith.constant 1 : i32
    %0 = arith.muli %arg1, %c1_i32 : i32
    %1 = arith.addi %0, %arg2 : i32
    %c0_i32 = arith.constant 0 : i32
    %2 = arith.minsi %1, %c0_i32 : i32
    %c0_i32_0 = arith.constant 0 : i32
    %c0_i32_1 = arith.constant 0 : i32
    return %arg0, %c0_i32_0, %2 : i32, i32, i32
  }
  func.func @transform_2(%arg0: i32, %arg1: i32, %arg2: i32) -> (i32, i32, i32, i32) {
    %c0_i32 = arith.constant 0 : i32
    %c0_i32_0 = arith.constant 0 : i32
    %c0_i32_1 = arith.constant 0 : i32
    return %arg0, %arg1, %c0_i32, %c0_i32_0 : i32, i32, i32, i32
  }
  func.func @transform_3(%arg0: i32, %arg1: i32, %arg2: i32) -> (i32, i32, i32, i32) {
    %c0_i32 = arith.constant 0 : i32
    %c0_i32_0 = arith.constant 0 : i32
    %c0_i32_1 = arith.constant 0 : i32
    return %arg0, %arg1, %c0_i32, %c0_i32_0 : i32, i32, i32, i32
  }
}

</mosaic_0001>

<llo_original>
// kernel: tpu_custom_call.1
$region0: #{tpu_custom_call.1}
  #allocation0 [shape = 'u32[]', space=smem, size = 0x4, offset = 0x4, fixed_abs, tag = 'smem constant byte address 0x4 - core index']
  #allocation1 [shape = 'u32[144,128]{1,0:T(1,128)}', space=vmem, size = 0x12000, scoped, tag = 'internal scratch']
  #allocation2 [shape = 'f32[1,16]{1,0:T(1,128)}', space=vmem, size = 0x200, scoped, tag = 'scratch operand']
  #allocation3 [shape = 's32[1,16]{1,0:T(1,128)}', space=vmem, size = 0x200, scoped, tag = 'scratch operand']
  %s0 = inlined_call_operand.hbm [shape: f32[2,4,16], index: 0, kind: input, shape index: {}]
  %s1 = inlined_call_operand.vmem [shape: u8[2,1,16], index: 1, kind: input, shape index: {}]
  %s2 = inlined_call_operand.hbm [shape: f32[2,1,1,16], index: 2, kind: output, shape index: {0}]
  %s3 = inlined_call_operand.hbm [shape: s32[2,1,1,16], index: 3, kind: output, shape index: {1}]
  %4 = xla_tuple %s2, %s3
  %s5 = sld [smem:[#allocation0]]
  $region61: #{tpu_custom_call.1} parent=0
    _
  %s7 = ssub.s32 1, %s5
  %s8 = scalar_select 0, %s7, %s5
  $region1: #{tpu_custom_call.1} parent=0
    #allocation4 [shape = 'u8[4096]{0}', space=vmem, size = 0x1000, scoped, tag = 'input window, operand 0']
    #allocation5 [shape = 's32[2]{0}', space=sflag, size = 0x8, scoped, tag = 'scoped memory for tpu_custom_call.1']
    #allocation6 [shape = 's32[2]{0}', space=sflag, size = 0x8, scoped, tag = 'scoped memory for tpu_custom_call.1']
    #allocation7 [shape = 'u8[1024]{0}', space=vmem, size = 0x400, scoped, tag = 'output window, operand 0']
    #allocation8 [shape = 'u8[1024]{0}', space=vmem, size = 0x400, scoped, tag = 'output window, operand 1']
    #allocation9 [shape = 's32[2]{0}', space=sflag, size = 0x8, scoped, tag = 'scoped memory for tpu_custom_call.1']
    %9 = vsyncpa [#allocation5], 0
    %s10 = scalar_lea.sflag [#allocation5], 1
    %11 = vsyncpa %s10, 0
    %12 = vsyncpa [#allocation6], 0
    %s13 = scalar_lea.sflag [#allocation6], 1
    %14 = vsyncpa %s13, 0
    %15 = vsyncpa [#allocation9], 0
    %s16 = scalar_lea.sflag [#allocation9], 1
    %17 = vsyncpa %s16, 0
    loop: start=0, step=1, limit=4
    $region2: #{tpu_custom_call.1} parent=1 // loop_pre_header
      _
    $region3: #{tpu_custom_call.1} parent=1 // loop_header
      %s19 = sphi 0, %s23
      %p20 = scmp.ge.s32.totalorder %s19, 4
      %s26 = sphi 0, %s45
      %s27 = sphi 0, %s41
      %s28 = sphi 0, %s37
      %s29 = sphi 0, %s26
      %s30 = sphi 0, %s27
      %s31 = sphi 0, %s28
      %s32 = sphi 0, %s29
      %s33 = sphi 0, %s30
      %s34 = sphi 0, %s31
      %s56 = sphi 0, %s58
      %s59 = sphi 0, %s56
      %s60 = sphi 0, %s59
      %s76 = sphi 0, %s60
      %s90 = sphi 0, %s92
      %s93 = sphi 0, %s90
      %s94 = sphi 0, %s93
      %s110 = sphi 0, %s94
      %s118 = sphi 0, %s120
      %s121 = sphi 0, %s118
      %s122 = sphi 0, %s121
      %s138 = sphi 0, %s122
      %s146 = sphi 0, %s148
      %s149 = sphi 0, %s146
      %s150 = sphi 0, %s149
      %s166 = sphi 0, %s150
    $region4: #{tpu_custom_call.1} parent=1 // loop_header_branch
      %22 = sbr.rel (%p20) target = $region8
    $region5: #{tpu_custom_call.1} parent=1 // loop_body
      %s24 = ssub.s32 %s19, 1
      %s25 = ssub.s32 %s19, 2
      %s35 = sadd.s32 1, %s28
      %p36 = scmp.ge.s32.totalorder %s35, 1
      %s37 = scalar_select %p36, 0, %s35
      %s38 = sadd.s32 1, %s27
      %s39 = scalar_select %p36, %s38, %s27
      %p40 = scmp.ge.s32.totalorder %s39, 1
      %s41 = scalar_select %p40, 0, %s39
      %s42 = sadd.s32 1, %s26
      %s43 = scalar_select %p40, %s42, %s26
      %p44 = scmp.ge.s32.totalorder %s43, 2
      %s45 = scalar_select %p44, 0, %s43
      %s46 = sadd.s32 %s27, %s28
      %p47 = scmp.lt.s32.totalorder %s46, 0
      %s48 = scalar_select %p47, %s46, 0
      %s49 = sadd.s32 %s41, %s37
      %p50 = scmp.lt.s32.totalorder %s49, 0
      %s51 = scalar_select %p50, %s49, 0
      %s52 = ssub.s32 %s26, %s45
      %s53 = ssub.s32 %s48, %s51
      %s54 = sor.u32 %s52, %s53
      %p55 = scmp.eq.s32.totalorder %s54, 0
      %s57 = sadd.s32 %s56, 1
      %s58 = scalar_select %p55, %s56, %s57
      %p61 = pneg %p55
      %p62 = scmp.eq.s32.totalorder %s19, 1
      %p63 = por %p61, %p62
      %p64 = scmp.ne.s32.totalorder %s56, %s59
      %p65 = scmp.eq.s32.totalorder %s19, 0
      %p66 = por %p64, %p65
      %p67 = scmp.ne.s32.totalorder %s56, %s59
      %p68 = scmp.eq.s32.totalorder %s24, 1
      %p69 = por %p67, %p68
      %p70 = scmp.ne.s32.totalorder %s59, %s60
      %p71 = scmp.eq.s32.totalorder %s24, 0
      %p72 = por %p70, %p71
      %p73 = scmp.ne.s32.totalorder %s59, %s60
      %p74 = scmp.eq.s32.totalorder %s25, 1
      %p75 = por %p73, %p74
      %p77 = scmp.ne.s32.totalorder %s60, %s76
      %p78 = scmp.eq.s32.totalorder %s25, 0
      %p79 = por %p77, %p78
      %s80 = sadd.s32 %s27, %s28
      %p81 = scmp.lt.s32.totalorder %s80, 0
      %s82 = scalar_select %p81, %s80, 0
      %s83 = sadd.s32 %s41, %s37
      %p84 = scmp.lt.s32.totalorder %s83, 0
      %s85 = scalar_select %p84, %s83, 0
      %s86 = ssub.s32 %s26, %s45
      %s87 = ssub.s32 %s82, %s85
      %s88 = sor.u32 %s86, %s87
      %p89 = scmp.eq.s32.totalorder %s88, 0
      %s91 = sadd.s32 %s90, 1
      %s92 = scalar_select %p89, %s90, %s91
      %p95 = pneg %p89
      %p96 = scmp.eq.s32.totalorder %s19, 1
      %p97 = por %p95, %p96
      %p98 = scmp.ne.s32.totalorder %s90, %s93
      %p99 = scmp.eq.s32.totalorder %s19, 0
      %p100 = por %p98, %p99
      %p101 = scmp.ne.s32.totalorder %s90, %s93
      %p102 = scmp.eq.s32.totalorder %s24, 1
      %p103 = por %p101, %p102
      %p104 = scmp.ne.s32.totalorder %s93, %s94
      %p105 = scmp.eq.s32.totalorder %s24, 0
      %p106 = por %p104, %p105
      %p107 = scmp.ne.s32.totalorder %s93, %s94
      %p108 = scmp.eq.s32.totalorder %s25, 1
      %p109 = por %p107, %p108
      %p111 = scmp.ne.s32.totalorder %s94, %s110
      %p112 = scmp.eq.s32.totalorder %s25, 0
      %p113 = por %p111, %p112
      %s114 = ssub.s32 %s26, %s45
      %s115 = ssub.s32 %s27, %s41
      %s116 = sor.u32 %s114, %s115
      %p117 = scmp.eq.s32.totalorder %s116, 0
      %s119 = sadd.s32 %s118, 1
      %s120 = scalar_select %p117, %s118, %s119
      %p123 = pneg %p117
      %p124 = scmp.eq.s32.totalorder %s19, 1
      %p125 = por %p123, %p124
      %p126 = scmp.ne.s32.totalorder %s118, %s121
      %p127 = scmp.eq.s32.totalorder %s19, 0
      %p128 = por %p126, %p127
      %p129 = scmp.ne.s32.totalorder %s118, %s121
      %p130 = scmp.eq.s32.totalorder %s24, 1
      %p131 = por %p129, %p130
      %p132 = scmp.ne.s32.totalorder %s121, %s122
      %p133 = scmp.eq.s32.totalorder %s24, 0
      %p134 = por %p132, %p133
      %p135 = scmp.ne.s32.totalorder %s121, %s122
      %p136 = scmp.eq.s32.totalorder %s25, 1
      %p137 = por %p135, %p136
      %p139 = scmp.ne.s32.totalorder %s122, %s138
      %p140 = scmp.eq.s32.totalorder %s25, 0
      %p141 = por %p139, %p140
      %s142 = ssub.s32 %s26, %s45
      %s143 = ssub.s32 %s27, %s41
      %s144 = sor.u32 %s142, %s143
      %p145 = scmp.eq.s32.totalorder %s144, 0
      %s147 = sadd.s32 %s146, 1
      %s148 = scalar_select %p145, %s146, %s147
      %p151 = pneg %p145
      %p152 = scmp.eq.s32.totalorder %s19, 1
      %p153 = por %p151, %p152
      %p154 = scmp.ne.s32.totalorder %s146, %s149
      %p155 = scmp.eq.s32.totalorder %s19, 0
      %p156 = por %p154, %p155
      %p157 = scmp.ne.s32.totalorder %s146, %s149
      %p158 = scmp.eq.s32.totalorder %s24, 1
      %p159 = por %p157, %p158
      %p160 = scmp.ne.s32.totalorder %s149, %s150
      %p161 = scmp.eq.s32.totalorder %s24, 0
      %p162 = por %p160, %p161
      %p163 = scmp.ne.s32.totalorder %s149, %s150
      %p164 = scmp.eq.s32.totalorder %s25, 1
      %p165 = por %p163, %p164
      %p167 = scmp.ne.s32.totalorder %s150, %s166
      %p168 = scmp.eq.s32.totalorder %s25, 0
      %p169 = por %p167, %p168
      %p170 = scmp.le.s32.totalorder 1, %s19
      %p171 = scmp.lt.s32.totalorder %s19, 3
      %p172 = pnand %p170, %p171
      %p173 = pneg %p172
      // Predicated region
      $region9: #{tpu_custom_call.1} parent=5 // pred_check
        _
      $region10: #{tpu_custom_call.1} parent=5 // pred_check_branch
        %175 = sbr.rel (%p172) target = $region12
      $region11: #{tpu_custom_call.1} parent=5 // pred_region
        %s176 = ssub.s32 %s19, 1
      $region12: #{tpu_custom_call.1} parent=5 // pred_fallthru
        _
      %p177 = scmp.lt.s32.totalorder %s19, 2
      // Predicated region
      $region13: #{tpu_custom_call.1} parent=5 // pred_check
        %p178 = pneg %p177
      $region14: #{tpu_custom_call.1} parent=5 // pred_check_branch
        %180 = sbr.rel (%p178) target = $region16
      $region15: #{tpu_custom_call.1} parent=5 // pred_region
        // Predicated region
        $region17: #{tpu_custom_call.1} parent=15 // pred_check
          %p181 = pneg %p66
        $region18: #{tpu_custom_call.1} parent=15 // pred_check_branch
          %183 = sbr.rel (%p181) target = $region20
        $region19: #{tpu_custom_call.1} parent=15 // pred_region
          %s184 = sand.u32 %s56, 1
          %s185 = scalar_lea.sflag [#allocation5], %s184
          %s186 = sand.u32 %s56, 1
          %s187 = smul.addr %s186, 4
          %s188 = scalar_lea.vmem [#allocation4], %s187
          %s189 = sadd.s32 %s27, %s28
          %p190 = scmp.lt.s32.totalorder %s189, 0
          %s191 = scalar_select %p190, %s189, 0
          %s193 = ssub.s32 64, 64
          %194 = vsyncadd %s185, %s193
          %s195 = sadd.s32 %s191, %s26
          %s196 = smul.addr %s195, 64
          %s197 = scalar_lea.hbm %s0, %s196
          %s199 = sshll.u32 %s188, 4
          %s200 = int_to_ptr.vmem [resolvable:$true] %s199
          %202 = dma.hbm_to_vmem [thread:$0]  %s197, 64, %s200, %s185
        $region20: #{tpu_custom_call.1} parent=15 // pred_fallthru
          _
        // Predicated region
        $region21: #{tpu_custom_call.1} parent=15 // pred_check
          %p203 = pneg %p100
        $region22: #{tpu_custom_call.1} parent=15 // pred_check_branch
          %205 = sbr.rel (%p203) target = $region24
        $region23: #{tpu_custom_call.1} parent=15 // pred_region
          %s206 = sadd.s32 %s27, %s28
          %p207 = scmp.lt.s32.totalorder %s206, 0
          %s208 = scalar_select %p207, %s206, 0
          %p209 = scmp.lt.s32.totalorder %s26, 1
          %s210 = scalar_select %p209, %s26, 1
          %p211 = scmp.lt.s32.totalorder %s208, 0
          %s212 = scalar_select %p211, %s208, 0
          %s213 = sadd.s32 %s212, %s210
          %s214 = scalar_lea.vmem %s1, %s213
          %s215 = sadd.s32 %s27, %s28
          %p216 = scmp.lt.s32.totalorder %s215, 0
          %s217 = scalar_select %p216, %s215, 0
        $region24: #{tpu_custom_call.1} parent=15 // pred_fallthru
          _
      $region16: #{tpu_custom_call.1} parent=5 // pred_fallthru
        _
      %p218 = scmp.le.s32.totalorder 1, %s19
      %p219 = scmp.lt.s32.totalorder %s19, 3
      %p220 = pnand %p218, %p219
      %p221 = pneg %p220
      // Predicated region
      $region25: #{tpu_custom_call.1} parent=5 // pred_check
        _
      $region26: #{tpu_custom_call.1} parent=5 // pred_check_branch
        %223 = sbr.rel (%p220) target = $region28
      $region27: #{tpu_custom_call.1} parent=5 // pred_region
        %s224 = ssub.s32 %s19, 1
        %s225 = sand.u32 %s59, 1
        %s226 = scalar_lea.sflag [#allocation5], %s225
        %s227 = sand.u32 %s59, 1
        %s228 = smul.addr %s227, 4
        %s229 = scalar_lea.vmem [#allocation4], %s228
        // Predicated region
        $region29: #{tpu_custom_call.1} parent=27 // pred_check
          %p230 = pneg %p72
        $region30: #{tpu_custom_call.1} parent=27 // pred_check_branch
          %232 = sbr.rel (%p230) target = $region32
        $region31: #{tpu_custom_call.1} parent=27 // pred_region
          %233 = dma.done %s226, 64
        $region32: #{tpu_custom_call.1} parent=27 // pred_fallthru
          _
        %s234 = sand.u32 %s59, 1
        %s235 = scalar_lea.sflag [#allocation5], %s234
        %s236 = sand.u32 %s59, 1
        %s237 = smul.addr %s236, 4
        %s238 = scalar_lea.vmem [#allocation4], %s237
        %p239 = pneg %p72
        %p240 = pneg %p69
        %s241 = sadd.s32 %s30, %s31
        %p242 = scmp.lt.s32.totalorder %s241, 0
        %s243 = scalar_select %p242, %s241, 0
        %p244 = scmp.lt.s32.totalorder %s29, 1
        %s245 = scalar_select %p244, %s29, 1
        %p246 = scmp.lt.s32.totalorder %s243, 0
        %s247 = scalar_select %p246, %s243, 0
        %s248 = sadd.s32 %s247, %s245
        %s249 = scalar_lea.vmem %s1, %s248
        %p250 = pneg %p106
        %p251 = pneg %p103
        %p252 = pneg %p134
        %p253 = pneg %p131
        %s254 = sand.u32 %s121, 1
        %s255 = scalar_lea.sflag [#allocation6], %s254
        %s256 = sand.u32 %s121, 1
        %s257 = scalar_lea.vmem [#allocation7], %s256
        %p258 = pneg %p162
        %p259 = pneg %p159
        %s260 = sand.u32 %s149, 1
        %s261 = scalar_lea.sflag [#allocation9], %s260
        %s262 = sand.u32 %s149, 1
        %s263 = scalar_lea.vmem [#allocation8], %s262
        %s264 = sadd.s32 %s30, %s31
        %p265 = scmp.lt.s32.totalorder %s264, 0
        %s266 = scalar_select %p265, %s264, 0
        %s267 = sadd.s32 %s30, %s31
        %p268 = scmp.lt.s32.totalorder %s267, 0
        %s269 = scalar_select %p268, %s267, 0
        %p270 = scmp.lt.s32.totalorder %s29, 1
        %s271 = scalar_select %p270, %s29, 1
        %p272 = scmp.lt.s32.totalorder %s269, 0
        %s273 = scalar_select %p272, %s269, 0
        %s274 = sadd.s32 %s273, %s271
        %s275 = scalar_lea.vmem %s1, %s274
        %s276 = sadd.s32 %s30, %s31
        %p277 = scmp.lt.s32.totalorder %s276, 0
        %s278 = scalar_select %p277, %s276, 0
        %p279 = scmp.eq.s32.totalorder %s31, 0
        // Predicated region
        $region33: #{tpu_custom_call.1} parent=27 // pred_check
          %p280 = pneg %p279
        $region34: #{tpu_custom_call.1} parent=27 // pred_check_branch
          %282 = sbr.rel (%p280) target = $region36
        $region35: #{tpu_custom_call.1} parent=27 // pred_region
          %vm283 = vcmask 122880
          %284 = vst.msk [vmem:[#allocation2] sm:$0x1] %vm283, 0.0
          %285 = vst.msk [vmem:[#allocation3] sm:$0x1] %vm283, 0
        $region36: #{tpu_custom_call.1} parent=27 // pred_fallthru
          _
        %v286 = vld [vmem:[%s229] sm:$0xf]
        %v287 = vld [vmem:[%s275] sm:$0x1]
        %v288 = vunpack.c.0.s8 %v287
        %v289 = vand.u32 %v288, 255
        %vm290 = vcmask 125952
        %v291 = vsel %vm290, %v286, -inf
        %v292 = vrot.slane %v291, 4
        %v293 = vmax.f32 %v291, %v292
        %v294 = vrot.slane %v293, 2
        %v295 = vmax.f32 %v293, %v294
        %v296 = vrot.slane %v295, 1
        %v297 = vmax.f32 %v295, %v296
        %v298 = vsub.f32 %v286, %v297
        %v299 = vmul.f32 %v298, 1.442695
        %v300 = vpow.pop %v299
        %v301 = vsel %vm290, %v300, 0.0
        %v302 = vrot.slane %v301, 4
        %v303 = vadd.f32 %v301, %v302
        %v304 = vrot.slane %v303, 2
        %v305 = vadd.f32 %v303, %v304
        %v306 = vrot.slane %v305, 1
        %v307 = vadd.f32 %v305, %v306
        %v308 = vlog2.pop %v307
        %v309 = vmul.f32 %v308, 0.6931472
        %v310 = vadd.f32 %v309, %v297
        %v311 = vlaneseq
        %v312 = vshrl.u32 %v311, 7
        %v313 = vlaneseq
        %v314 = vshrl.u32 %v313, 7
        %v315 = vsub.s32 0, %v314
        %v316 = vrot.slane %v289, %v315
        %vm317 = vcmp.eq.s32.totalorder %v312, %v316
        %v318 = vsel %vm317, %v286, 0.0
        %v319 = vsel %vm290, %v318, 0.0
        %v320 = vrot.slane %v319, 4
        %v321 = vadd.f32 %v319, %v320
        %v322 = vrot.slane %v321, 2
        %v323 = vadd.f32 %v321, %v322
        %v324 = vrot.slane %v323, 1
        %v325 = vadd.f32 %v323, %v324
        %s326 = sadd.s32 %s30, %s31
        %v327 = vlaneseq
        %v328 = vand.u32 %v327, 127
        %s329 = smul.u32 %s326, 16
        %v330 = vstv %s329
        %v331 = vadd.s32 %v328, %v330
        %vm332 = vcmp.ne.s32.totalorder %v289, 255
        %vm333 = vcmp.lt.s32.totalorder %v331, 16
        %vm334 = vmand %vm332, %vm333
        %v335 = vsub.f32 %v310, %v325
        %v336 = vsel %vm334, %v335, 0.0
        %v337 = vsel %vm334, 1, 0
        %v338 = vld [vmem:[#allocation2] sm:$0x1]
        %v339 = vadd.f32 %v338, %v336
        %vm340 = vcmask 122880
        %341 = vst.msk [vmem:[#allocation2] sm:$0x1] %vm340, %v339
        %v342 = vld [vmem:[#allocation3] sm:$0x1]
        %v343 = vadd.s32 %v342, %v337
        %344 = vst.msk [vmem:[#allocation3] sm:$0x1] %vm340, %v343
        // Predicated region
        $region37: #{tpu_custom_call.1} parent=27 // pred_check
          %p345 = pneg %p279
        $region38: #{tpu_custom_call.1} parent=27 // pred_check_branch
          %347 = sbr.rel (%p345) target = $region40
        $region39: #{tpu_custom_call.1} parent=27 // pred_region
          %v348 = vld [vmem:[#allocation2] sm:$0x1]
          %349 = vst.msk [vmem:[%s257] sm:$0x1] %vm340, %v348
          %v350 = vld [vmem:[#allocation3] sm:$0x1]
          %351 = vst.msk [vmem:[%s263] sm:$0x1] %vm340, %v350
        $region40: #{tpu_custom_call.1} parent=27 // pred_fallthru
          _
        %s352 = sand.u32 %s121, 1
        %s353 = scalar_lea.sflag [#allocation6], %s352
        %s354 = sand.u32 %s121, 1
        %s355 = scalar_lea.vmem [#allocation7], %s354
        %s356 = sand.u32 %s149, 1
        %s357 = scalar_lea.sflag [#allocation9], %s356
        %s358 = sand.u32 %s149, 1
        %s359 = scalar_lea.vmem [#allocation8], %s358
        // Predicated region
        $region41: #{tpu_custom_call.1} parent=27 // pred_check
          %p360 = pneg %p131
        $region42: #{tpu_custom_call.1} parent=27 // pred_check_branch
          %362 = sbr.rel (%p360) target = $region44
        $region43: #{tpu_custom_call.1} parent=27 // pred_region
          %s364 = ssub.s32 16, 16
          %365 = vsyncadd %s353, %s364
          %s366 = sadd.s32 %s30, %s29
          %s367 = smul.addr %s366, 16
          %s368 = scalar_lea.hbm %s2, %s367
          %s370 = sshll.u32 %s355, 4
          %s371 = int_to_ptr.vmem [resolvable:$true] %s370
          %373 = dma.vmem_to_hbm [thread:$0]  %s371, 16, %s368, %s353
        $region44: #{tpu_custom_call.1} parent=27 // pred_fallthru
          _
        // Predicated region
        $region45: #{tpu_custom_call.1} parent=27 // pred_check
          %p374 = pneg %p159
        $region46: #{tpu_custom_call.1} parent=27 // pred_check_branch
          %376 = sbr.rel (%p374) target = $region48
        $region47: #{tpu_custom_call.1} parent=27 // pred_region
          %s378 = ssub.s32 16, 16
          %379 = vsyncadd %s357, %s378
          %s380 = sadd.s32 %s30, %s29
          %s381 = smul.addr %s380, 16
          %s382 = scalar_lea.hbm %s3, %s381
          %s384 = sshll.u32 %s359, 4
          %s385 = int_to_ptr.vmem [resolvable:$true] %s384
          %387 = dma.vmem_to_hbm [thread:$0]  %s385, 16, %s382, %s357
        $region48: #{tpu_custom_call.1} parent=27 // pred_fallthru
          _
      $region28: #{tpu_custom_call.1} parent=5 // pred_fallthru
        _
      %p388 = scmp.le.s32.totalorder 2, %s19
      // Predicated region
      $region49: #{tpu_custom_call.1} parent=5 // pred_check
        %p389 = pneg %p388
      $region50: #{tpu_custom_call.1} parent=5 // pred_check_branch
        %391 = sbr.rel (%p389) target = $region52
      $region51: #{tpu_custom_call.1} parent=5 // pred_region
        %s392 = ssub.s32 %s19, 2
        // Predicated region
        $region53: #{tpu_custom_call.1} parent=51 // pred_check
          %p393 = pneg %p137
        $region54: #{tpu_custom_call.1} parent=51 // pred_check_branch
          %395 = sbr.rel (%p393) target = $region56
        $region55: #{tpu_custom_call.1} parent=51 // pred_region
          %s396 = sand.u32 %s122, 1
          %s397 = scalar_lea.sflag [#allocation6], %s396
          %s398 = sand.u32 %s122, 1
          %s399 = scalar_lea.vmem [#allocation7], %s398
          %400 = dma.done %s397, 16
        $region56: #{tpu_custom_call.1} parent=51 // pred_fallthru
          _
        // Predicated region
        $region57: #{tpu_custom_call.1} parent=51 // pred_check
          %p401 = pneg %p165
        $region58: #{tpu_custom_call.1} parent=51 // pred_check_branch
          %403 = sbr.rel (%p401) target = $region60
        $region59: #{tpu_custom_call.1} parent=51 // pred_region
          %s404 = sand.u32 %s150, 1
          %s405 = scalar_lea.sflag [#allocation9], %s404
          %s406 = sand.u32 %s150, 1
          %s407 = scalar_lea.vmem [#allocation8], %s406
          %408 = dma.done %s405, 16
        $region60: #{tpu_custom_call.1} parent=51 // pred_fallthru
          _
      $region52: #{tpu_custom_call.1} parent=5 // pred_fallthru
        _
    $region6: #{tpu_custom_call.1} parent=1 // loop_footer
      %s23 = sadd.s32 1, %s19
    $region7: #{tpu_custom_call.1} parent=1 // loop_footer_branch
      %18 = sbr.rel target = $region3
    $region8: #{tpu_custom_call.1} parent=1 // loop_exit
      _
    %409 = vsyncpa [#allocation5], 1
    %s410 = scalar_lea.sflag [#allocation5], 1
    %411 = vsyncpa %s410, 1
    %412 = vsyncpa [#allocation6], 1
    %s413 = scalar_lea.sflag [#allocation6], 1
    %414 = vsyncpa %s413, 1
    %415 = vsyncpa [#allocation9], 1
    %s416 = scalar_lea.sflag [#allocation9], 1
    %417 = vsyncpa %s416, 1

</llo_original>
